<compile_context>
chip_gen: v6e
topology: v6e:2x2x1
jax: 0.10.0
libtpu: 0.0.40
codegen_flags: <defaults>
</compile_context>

<pallas_src>
import functools

import jax
import jax.numpy as jnp
from jax.experimental import pallas as pl
from jax.experimental.pallas import tpu as pltpu


# ---------------------------------------------------------------------------
# Kernel bodies
# ---------------------------------------------------------------------------

def _maxout_flat_kernel(x_ref, o_ref, *, pool_size, hw):
    """x_ref: (r_tile, pool_size*hw), o_ref: (r_tile, hw); hw % 128 == 0.

    Every pool chunk is a lane-aligned slice -> pure-VPU elementwise maxes,
    no XLU relayouts, lane-dense store.
    """
    acc = x_ref[:, 0:hw]
    for k in range(1, pool_size):
        acc = jnp.maximum(acc, x_ref[:, k * hw:(k + 1) * hw])
    o_ref[...] = acc


def _maxout_pool_axis_kernel(x_ref, o_ref):
    """x_ref: (r_tile, pool_size, l_tile), o_ref: (r_tile, l_tile)."""
    o_ref[...] = jnp.max(x_ref[...], axis=1)


# ---------------------------------------------------------------------------
# Sizing helpers
# ---------------------------------------------------------------------------

_SPLIT_BYTES = 8 * 1024 * 1024   # below this, a single grid step (1-TC chips win)


def _sublane_multiple(dtype):
    # f32 -> 8, bf16 -> 16, int8/fp8 -> 32 (sub-32-bit dtypes pack sublanes).
    itemsize = jnp.dtype(dtype).itemsize
    return max(8, 32 // itemsize)


def _vmem_sizing():
    """Device-aware (v5e/v6e: 128 MiB, v7x: 64 MiB) block budget + limit."""
    try:
        cap = int(pltpu.get_tpu_info().vmem_capacity_bytes)
    except Exception:
        cap = 64 * 1024 * 1024                      # conservative (v7x-sized)
    vmem_limit = max(32 * 1024 * 1024, (cap * 3) // 4)
    # Double-buffered (in block + out block) must stay under the limit.
    block_budget = max(4 * 1024 * 1024, vmem_limit // 2 - (2 << 20))
    return block_budget, vmem_limit


def _round_up(v, m):
    return ((v + m - 1) // m) * m


def _row_tiling(rows, sub, r_cap, total_bytes):
    """Rows per block + number of row grid-steps.

    Single step for small problems (skip the pointless split on single-TC
    v5e/v6e); for real DMA work an EVEN number of near-equal steps so both
    v7x TensorCores get balanced work under megacore sharding.
    """
    r_cap = max(sub, (r_cap // sub) * sub)
    if rows <= r_cap and total_bytes < _SPLIT_BYTES:
        return rows, 1                         # block == full dim, one DMA
    n_steps = max(pl.cdiv(rows, r_cap), 2)
    if n_steps % 2:
        n_steps += 1                           # balanced even steps for 2 TCs
    r_tile = min(_round_up(pl.cdiv(rows, n_steps), sub), r_cap)
    return r_tile, pl.cdiv(rows, r_tile)


# ---------------------------------------------------------------------------
# pallas_call wrappers
# ---------------------------------------------------------------------------

def _maxout_flat(x2, pool_size, hw, sub, block_budget, vmem_limit, total_bytes):
    rows = x2.shape[0]
    itemsize = jnp.dtype(x2.dtype).itemsize
    per_row = (pool_size + 1) * hw * itemsize          # input row + output row
    r_tile, n_steps = _row_tiling(rows, sub, block_budget // per_row,
                                  total_bytes)
    kernel = functools.partial(_maxout_flat_kernel, pool_size=pool_size, hw=hw)
    return pl.pallas_call(
        kernel,
        out_shape=jax.ShapeDtypeStruct((rows, hw), x2.dtype),
        grid_spec=pltpu.PrefetchScalarGridSpec(
            num_scalar_prefetch=0,
            grid=(n_steps,),
            in_specs=[pl.BlockSpec((r_tile, pool_size * hw), lambda i: (i, 0))],
            out_specs=pl.BlockSpec((r_tile, hw), lambda i: (i, 0)),
        ),
        compiler_params=pltpu.CompilerParams(
            dimension_semantics=("parallel",),
            vmem_limit_bytes=vmem_limit,
        ),
    )(x2)


def _maxout_pool_axis(x3, sub, block_budget, vmem_limit, total_bytes):
    rows, p, lanes = x3.shape
    itemsize = jnp.dtype(x3.dtype).itemsize
    # Lane tile: full extent when even a sub-row block fits the budget,
    # otherwise a 128-multiple chunk (second grid axis tiles the lanes).
    if lanes <= 128 or (p + 1) * sub * lanes * itemsize <= block_budget:
        l_tile = lanes
    else:
        l_cap = block_budget // ((p + 1) * sub * itemsize)
        l_tile = max(128, (l_cap // 128) * 128)
    r_cap = block_budget // ((p + 1) * l_tile * itemsize)
    r_tile, n_row_steps = _row_tiling(rows, sub, r_cap, total_bytes)
    grid = (n_row_steps, pl.cdiv(lanes, l_tile))
    return pl.pallas_call(
        _maxout_pool_axis_kernel,
        out_shape=jax.ShapeDtypeStruct((rows, lanes), x3.dtype),
        grid_spec=pltpu.PrefetchScalarGridSpec(
            num_scalar_prefetch=0,
            grid=grid,
            in_specs=[pl.BlockSpec((r_tile, p, l_tile), lambda i, j: (i, 0, j))],
            out_specs=pl.BlockSpec((r_tile, l_tile), lambda i, j: (i, j)),
        ),
        compiler_params=pltpu.CompilerParams(
            dimension_semantics=("parallel", "parallel"),
            vmem_limit_bytes=vmem_limit,
        ),
    )(x3)


# ---------------------------------------------------------------------------
# Public entry point (matches the PyTorch Maxout.forward, incl. torch.squeeze)
# ---------------------------------------------------------------------------

def maxout(x, pool_size=4):
    assert x.shape[1] % pool_size == 0, (
        "Wrong input last dim size ({}) for Maxout({})".format(x.shape[1],
                                                               pool_size))
    n, c = x.shape[0], x.shape[1]
    spatial = tuple(x.shape[2:])
    hw = 1
    for s in spatial:
        hw *= s
    groups = c // pool_size

    dtype = x.dtype
    itemsize = jnp.dtype(dtype).itemsize
    sub = _sublane_multiple(dtype)
    block_budget, vmem_limit = _vmem_sizing()
    total_bytes = x.size * itemsize

    flat_ok = (hw % 128 == 0) and (
        sub * (pool_size + 1) * hw * itemsize <= block_budget)

    if flat_ok:
        # Path A: lane-contiguous pool chunks, pure reshape, pure-VPU reduce.
        x2 = x.reshape(n * groups, pool_size * hw)
        out = _maxout_flat(x2, pool_size, hw, sub, block_budget, vmem_limit,
                           total_bytes).reshape((n, groups) + spatial)
    elif hw <= 8:
        # Path C: tiny / no spatial extent -> put GROUPS on the lane axis
        # (one transpose pass, but dense 128-lane DMA/stores instead of
        # padding a pool_size-wide lane dim to 128).
        x3 = jnp.transpose(x.reshape(n, groups, pool_size, hw), (0, 2, 1, 3))
        x3 = x3.reshape(n, pool_size, groups * hw)
        out = _maxout_pool_axis(x3, sub, block_budget, vmem_limit,
                                total_bytes).reshape((n, groups) + spatial)
    else:
        # Path B: general fallback -- pool axis on sublanes, hw on lanes
        # (tiled along a second grid axis when a single-row block is too big).
        x3 = x.reshape(n * groups, pool_size, hw)
        out = _maxout_pool_axis(x3, sub, block_budget, vmem_limit,
                                total_bytes).reshape((n, groups) + spatial)

    # torch.squeeze removes ALL size-1 dims (matches the reference module).
    # TODO(synk): the reference's trailing .cuda() device move has no Pallas
    # equivalent; the result simply stays on the default TPU device.
    return jnp.squeeze(out)


if __name__ == "__main__":
    key = jax.random.PRNGKey(0)
    # Small NCHW input consistent with the module: batch=2, channels=4
    # (== pool_size), spatial 16x16.
    x = jax.random.normal(key, (2, 4, 16, 16), dtype=jnp.float32)

    y = maxout(x, pool_size=4)
    y = jax.block_until_ready(y)

    # Reference check in plain JAX (mirrors the PyTorch view/max/squeeze).
    ref = jnp.squeeze(jnp.max(x.reshape(2, 1, 4, 16, 16), axis=2))
    assert y.shape == ref.shape, (y.shape, ref.shape)
    assert jnp.allclose(y, ref), "mismatch vs reference"

    print("KERNEL_OK")
</pallas_src>

<mosaic_0001>
module attributes {stable_mosaic.version = 11 : i64} {
  func.func @_maxout_flat_kernel(%arg0: i32, %arg1: memref<2x1024xf32, #tpu.memory_space<vmem>>, %arg2: memref<2x256xf32, #tpu.memory_space<vmem>>) attributes {dimension_semantics = [#tpu.dimension_semantics<parallel>], iteration_bounds = array<i64: 1>, scalar_prefetch = 0 : i64, scratch_operands = 0 : i64, tpu.core_type = #tpu.core_type<tc>, window_params = [{transform_indices = @transform_0, window_bounds = array<i64: 2, 1024>}, {transform_indices = @transform_1, window_bounds = array<i64: 2, 256>}]} {
    %c0 = arith.constant 0 : index
    %c0_0 = arith.constant 0 : index
    %0 = vector.load %arg1[%c0, %c0_0] : memref<2x1024xf32, #tpu.memory_space<vmem>>, vector<2x256xf32>
    %c0_1 = arith.constant 0 : index
    %c256 = arith.constant 256 : index
    %1 = vector.load %arg1[%c0_1, %c256] : memref<2x1024xf32, #tpu.memory_space<vmem>>, vector<2x256xf32>
    %2 = arith.maximumf %0, %1 : vector<2x256xf32>
    %c0_2 = arith.constant 0 : index
    %c512 = arith.constant 512 : index
    %3 = vector.load %arg1[%c0_2, %c512] : memref<2x1024xf32, #tpu.memory_space<vmem>>, vector<2x256xf32>
    %4 = arith.maximumf %2, %3 : vector<2x256xf32>
    %c0_3 = arith.constant 0 : index
    %c768 = arith.constant 768 : index
    %5 = vector.load %arg1[%c0_3, %c768] : memref<2x1024xf32, #tpu.memory_space<vmem>>, vector<2x256xf32>
    %6 = arith.maximumf %4, %5 : vector<2x256xf32>
    %c0_4 = arith.constant 0 : index
    %c0_5 = arith.constant 0 : index
    %7 = vector.load %arg2[%c0_4, %c0_5] : memref<2x256xf32, #tpu.memory_space<vmem>>, vector<2x256xf32>
    tpu.vector_store %arg2[%c0_4, %c0_5], %6 {strides = array<i32>} : memref<2x256xf32, #tpu.memory_space<vmem>>, vector<2x256xf32>,
    return
  }
  func.func @transform_0(%arg0: i32) -> (i32, i32) {
    %c0_i32 = arith.constant 0 : i32
    %c0_i32_0 = arith.constant 0 : i32
    return %arg0, %c0_i32 : i32, i32
  }
  func.func @transform_1(%arg0: i32) -> (i32, i32) {
    %c0_i32 = arith.constant 0 : i32
    %c0_i32_0 = arith.constant 0 : i32
    return %arg0, %c0_i32 : i32, i32
  }
}

</mosaic_0001>

<llo_original>
// kernel: tpu_custom_call.1
$region0: #{tpu_custom_call.1}
  #allocation0 [shape = 'u32[]', space=smem, size = 0x4, offset = 0x4, fixed_abs, tag = 'smem constant byte address 0x4 - core index']
  #allocation1 [shape = 'u32[144,128]{1,0:T(1,128)}', space=vmem, size = 0x12000, scoped, tag = 'internal scratch']
  %s0 = inlined_call_operand.hbm [shape: f32[2,1024], index: 0, kind: input, shape index: {}]
  %s1 = inlined_call_operand.hbm [shape: f32[2,256], index: 1, kind: output, shape index: {}]
  %s2 = sld [smem:[#allocation0]]
  $region18: #{tpu_custom_call.1} parent=0
    _
  %s4 = ssub.s32 1, %s2
  %s5 = scalar_select 0, %s4, %s2
  $region1: #{tpu_custom_call.1} parent=0
    #allocation2 [shape = 'u8[8192]{0}', space=vmem, size = 0x2000, scoped, tag = 'input window, operand 0, single buffered']
    #allocation3 [shape = 's32[1]{0}', space=sflag, size = 0x4, scoped, tag = 'scoped memory for tpu_custom_call.1']
    #allocation4 [shape = 's32[1]{0}', space=sflag, size = 0x4, scoped, tag = 'scoped memory for tpu_custom_call.1']
    #allocation5 [shape = 'u8[2048]{0}', space=vmem, size = 0x800, scoped, tag = 'output window, operand 0, single buffered']
    %6 = vsyncpa [#allocation3], 0
    %7 = vsyncpa [#allocation4], 0
    // Predicated region
    $region2: #{tpu_custom_call.1} parent=1 // pred_check
      _
    $region3: #{tpu_custom_call.1} parent=1 // pred_check_branch
      %9 = sbr.rel (0) target = $region5
    $region4: #{tpu_custom_call.1} parent=1 // pred_region
      %s11 = ssub.s32 256, 256
      %12 = vsyncadd [#allocation3], %s11
      %s14 = sshll.u32 [#allocation2], 4
      %s15 = int_to_ptr.vmem [resolvable:$true] %s14
      %17 = dma.hbm_to_vmem [thread:$0]  %s0, 256, %s15, [#allocation3]
    $region5: #{tpu_custom_call.1} parent=1 // pred_fallthru
      _
    // Predicated region
    $region6: #{tpu_custom_call.1} parent=1 // pred_check
      _
    $region7: #{tpu_custom_call.1} parent=1 // pred_check_branch
      %19 = sbr.rel (0) target = $region9
    $region8: #{tpu_custom_call.1} parent=1 // pred_region
      %20 = dma.done [#allocation3], 256
    $region9: #{tpu_custom_call.1} parent=1 // pred_fallthru
      _
    %v21 = vld [vmem:[#allocation2] sm:$0xf]
    %v22 = vld [vmem:[#allocation2 + $0x4] sm:$0xf]
    %v23 = vmax.f32 %v21, %v22
    %v24 = vld [vmem:[#allocation2 + $0x8] sm:$0xf]
    %v25 = vmax.f32 %v23, %v24
    %v26 = vld [vmem:[#allocation2 + $0xc] sm:$0xf]
    %v27 = vmax.f32 %v25, %v26
    %28 = vst [vmem:[#allocation5] sm:$0xf] %v27
    // Predicated region
    $region10: #{tpu_custom_call.1} parent=1 // pred_check
      _
    $region11: #{tpu_custom_call.1} parent=1 // pred_check_branch
      %30 = sbr.rel (0) target = $region13
    $region12: #{tpu_custom_call.1} parent=1 // pred_region
      %s32 = ssub.s32 64, 64
      %33 = vsyncadd [#allocation4], %s32
      %s35 = sshll.u32 [#allocation5], 4
      %s36 = int_to_ptr.vmem [resolvable:$true] %s35
      %38 = dma.vmem_to_hbm [thread:$0]  %s36, 64, %s1, [#allocation4]
    $region13: #{tpu_custom_call.1} parent=1 // pred_fallthru
      _
    // Predicated region
    $region14: #{tpu_custom_call.1} parent=1 // pred_check
      _
    $region15: #{tpu_custom_call.1} parent=1 // pred_check_branch
      %40 = sbr.rel (0) target = $region17
    $region16: #{tpu_custom_call.1} parent=1 // pred_region
      %41 = dma.done [#allocation4], 64
    $region17: #{tpu_custom_call.1} parent=1 // pred_fallthru
      _
    %42 = vsyncpa [#allocation3], 1
    %43 = vsyncpa [#allocation4], 1

</llo_original>
